<compile_context>
chip_gen: v7x
topology: tpu7x:2x2x1
jax: 0.10.0
libtpu: 0.0.40
codegen_flags: <defaults>
</compile_context>

<pallas_src>
import jax
import jax.numpy as jnp
from jax.experimental import pallas as pl
from jax.experimental.pallas import tpu as pltpu


def _leaky_relu(x, slope=0.2):
    return jnp.where(x >= 0, x, slope * x)


def _round_up(x, m):
    return ((x + m - 1) // m) * m


# --------------------------------------------------------------------------- pass 1
def _stats_kernel(x_ref, w1_ref, b1_ref, w2_ref, sum_ref, ssq_ref):
    """Accumulate per-channel sum(h2) and sum(h2*h2) for one batch slice.

    x_ref:  (Cin, TILE_P) bf16     w1_ref: (ndf, Cin) bf16    b1_ref: (ndf, 1) f32
    w2_ref: (ndf2, ndf) bf16       sum_ref/ssq_ref: (ndf2, 1) f32 per-batch accumulators
    """
    @pl.when(pl.program_id(1) == 0)
    def _():
        sum_ref[...] = jnp.zeros_like(sum_ref)
        ssq_ref[...] = jnp.zeros_like(ssq_ref)

    x = x_ref[...]                                                   # (Cin, TILE_P)
    h1 = jnp.dot(w1_ref[...], x, preferred_element_type=jnp.float32) + b1_ref[...]
    h1 = _leaky_relu(h1)                                             # (ndf, TILE_P) f32
    h2 = jnp.dot(w2_ref[...], h1.astype(jnp.bfloat16),
                 preferred_element_type=jnp.float32)                 # (ndf2, TILE_P) f32

    # Per-channel reductions on the VPU/XLU (keeps the MXU slot free for the convs).
    sum_ref[...] += jnp.sum(h2, axis=-1, keepdims=True)
    ssq_ref[...] += jnp.sum(h2 * h2, axis=-1, keepdims=True)


# --------------------------------------------------------------------------- pass 2
def _apply_kernel(x_ref, w1_ref, b1_ref, w2s_ref, shift_ref, w3_ref, o_ref):
    """conv1 -> lrelu -> (BN-scaled) conv2 + shift -> lrelu -> conv3.

    w2s_ref: (ndf2, ndf) bf16, BN scale pre-folded.   shift_ref: (ndf2, 1) f32.
    w3_ref:  (1, ndf2) bf16.                          o_ref: (1, TILE_P) f32.
    """
    x = x_ref[...]                                                   # (Cin, TILE_P)
    h1 = jnp.dot(w1_ref[...], x, preferred_element_type=jnp.float32) + b1_ref[...]
    h1 = _leaky_relu(h1)
    h2 = jnp.dot(w2s_ref[...], h1.astype(jnp.bfloat16),
                 preferred_element_type=jnp.float32) + shift_ref[...]   # folded BN
    h2 = _leaky_relu(h2)
    o_ref[...] = jnp.dot(w3_ref[...], h2.astype(jnp.bfloat16),
                         preferred_element_type=jnp.float32)         # (1, TILE_P)


# --------------------------------------------------------------------------- wrapper
def pixel_discriminator(x_nchw, params, *, tile_p=8192,
                        vmem_limit_bytes=32 * 1024 * 1024):
    """x_nchw: (N, Cin, H, W) float32.  Returns (N, 1, H, W) float32."""
    w1, b1, w2, gamma, beta, w3 = params
    n, cin, h, w = x_nchw.shape
    hw = h * w
    ndf = w1.shape[0]
    ndf2 = w2.shape[0]

    # Channel-major view: NCHW -> (N, Cin, H*W) is a free reshape (no HBM transpose).
    x3 = x_nchw.reshape(n, cin, hw).astype(jnp.bfloat16)

    tp = min(tile_p, _round_up(hw, 128))          # lane-aligned pixel tile
    hw_pad = _round_up(hw, tp)
    need_pad = hw_pad != hw
    if need_pad:
        x3 = jnp.pad(x3, ((0, 0), (0, 0), (0, hw_pad - hw)))
    n_tiles = hw_pad // tp

    w1b = w1.astype(jnp.bfloat16)
    w2b = w2.astype(jnp.bfloat16)
    w3b = w3.astype(jnp.bfloat16)
    b1f = b1.astype(jnp.float32)

    def const_spec(shape):
        return pl.BlockSpec(shape, lambda i, j: (0,) * len(shape))

    x_spec = pl.BlockSpec((None, cin, tp), lambda i, j: (i, 0, j))
    acc_spec = pl.BlockSpec((None, ndf2, 1), lambda i, j: (i, 0, 0))

    # ---- pass 1: per-batch BN partial statistics (sum, sum of squares) -------------
    ps, pss = pl.pallas_call(
        _stats_kernel,
        out_shape=(jax.ShapeDtypeStruct((n, ndf2, 1), jnp.float32),
                   jax.ShapeDtypeStruct((n, ndf2, 1), jnp.float32)),
        grid=(n, n_tiles),
        in_specs=[
            x_spec,
            const_spec((ndf, cin)),
            const_spec((ndf, 1)),
            const_spec((ndf2, ndf)),
        ],
        out_specs=(acc_spec, acc_spec),
        compiler_params=pltpu.CompilerParams(
            dimension_semantics=("parallel", "arbitrary"),
            vmem_limit_bytes=vmem_limit_bytes),
    )(x3, w1b, b1f, w2b)

    s = jnp.sum(ps, axis=0)                       # (ndf2, 1)
    ss = jnp.sum(pss, axis=0)

    if need_pad:
        # Padded pixel columns (x == 0) all produce the same constant
        # c = W2 @ leaky_relu(b1); remove their contribution analytically instead of
        # paying an iota+select mask on every tile inside the kernel.
        n_pad = jnp.float32(n * (hw_pad - hw))
        c = jnp.dot(w2b, _leaky_relu(b1f).astype(jnp.bfloat16),
                    preferred_element_type=jnp.float32)              # (ndf2, 1)
        s = s - n_pad * c
        ss = ss - n_pad * (c * c)

    # Tiny (ndf2, 1) math: fold BN into conv2's weights + one per-channel shift.
    count = jnp.float32(n * hw)
    mean = s / count
    var = jnp.maximum(ss / count - mean * mean, 0.0)      # biased var (BN training mode)
    scale = gamma.astype(jnp.float32) * jax.lax.rsqrt(var + 1e-5)
    shift = beta.astype(jnp.float32) - mean * scale
    w2_scaled = (w2.astype(jnp.float32) * scale).astype(jnp.bfloat16)

    # ---- pass 2: conv1 -> lrelu -> scaled conv2 + shift -> lrelu -> conv3 ----------
    out = pl.pallas_call(
        _apply_kernel,
        out_shape=jax.ShapeDtypeStruct((n, 1, hw_pad), jnp.float32),
        grid=(n, n_tiles),
        in_specs=[
            x_spec,
            const_spec((ndf, cin)),
            const_spec((ndf, 1)),
            const_spec((ndf2, ndf)),
            const_spec((ndf2, 1)),
            const_spec((1, ndf2)),
        ],
        out_specs=pl.BlockSpec((None, 1, tp), lambda i, j: (i, 0, j)),
        compiler_params=pltpu.CompilerParams(
            dimension_semantics=("parallel", "parallel"),
            vmem_limit_bytes=vmem_limit_bytes),
    )(x3, w1b, b1f, w2_scaled, shift, w3b)

    # (N, 1, HW_pad) -> drop pad -> (N, 1, H, W); free reshape, no transpose.
    return out[:, :, :hw].reshape(n, 1, h, w)


# --------------------------------------------------------------------------- params
def init_params(key, input_nc, ndf=64):
    """Deterministic synthetic parameters matching PixelDiscriminator.__init__ shapes.

    Conv weights keep the PyTorch (out_c, in_c) orientation (1x1 conv == per-pixel
    matmul, applied channel-major as W @ x).
    """
    k1, k2, k3, k4 = jax.random.split(key, 4)
    w1 = 0.1 * jax.random.normal(k1, (ndf, input_nc), jnp.float32)
    b1 = 0.1 * jax.random.normal(k2, (ndf, 1), jnp.float32)
    w2 = 0.1 * jax.random.normal(k3, (ndf * 2, ndf), jnp.float32)    # bias=False
    gamma = jnp.ones((ndf * 2, 1), jnp.float32)                      # BN default init
    beta = jnp.zeros((ndf * 2, 1), jnp.float32)
    w3 = 0.1 * jax.random.normal(k4, (1, ndf * 2), jnp.float32)      # bias=False
    return (w1, b1, w2, gamma, beta, w3)


if __name__ == "__main__":
    key = jax.random.PRNGKey(0)
    kx, kp = jax.random.split(key)

    N, C, H, W = 2, 4, 16, 16      # input_nc=4, ndf=64
    x = jax.random.normal(kx, (N, C, H, W), jnp.float32)
    params = init_params(kp, input_nc=C, ndf=64)

    out = pixel_discriminator(x, params)
    out = jax.block_until_ready(out)
    assert out.shape == (N, 1, H, W), out.shape
    assert bool(jnp.all(jnp.isfinite(out)))
    print("KERNEL_OK")
</pallas_src>

<mosaic_0001>
module attributes {stable_mosaic.version = 11 : i64} {
  func.func @_stats_kernel(%arg0: i32, %arg1: i32, %arg2: memref<1x4x256xbf16, #tpu.memory_space<vmem>>, %arg3: memref<64x4xbf16, #tpu.memory_space<vmem>>, %arg4: memref<64x1xf32, #tpu.memory_space<vmem>>, %arg5: memref<128x64xbf16, #tpu.memory_space<vmem>>, %arg6: memref<1x128x1xf32, #tpu.memory_space<vmem>>, %arg7: memref<1x128x1xf32, #tpu.memory_space<vmem>>) attributes {dimension_semantics = [#tpu.dimension_semantics<parallel>, #tpu.dimension_semantics<arbitrary>], iteration_bounds = array<i64: 2, 1>, scalar_prefetch = 0 : i64, scratch_operands = 0 : i64, tpu.core_type = #tpu.core_type<tc>, window_params = [{transform_indices = @transform_0, window_bounds = array<i64: 1, 4, 256>}, {pipeline_mode = #tpu.pipeline_mode<synchronous>, transform_indices = @transform_1, window_bounds = array<i64: 64, 4>}, {pipeline_mode = #tpu.pipeline_mode<synchronous>, transform_indices = @transform_2, window_bounds = array<i64: 64, 1>}, {pipeline_mode = #tpu.pipeline_mode<synchronous>, transform_indices = @transform_3, window_bounds = array<i64: 128, 64>}, {transform_indices = @transform_4, window_bounds = array<i64: 1, 128, 1>}, {transform_indices = @transform_5, window_bounds = array<i64: 1, 128, 1>}]} {
    %c0_i32 = arith.constant 0 : i32
    %0 = arith.cmpi eq, %arg1, %c0_i32 : i32
    %1 = arith.extui %0 : i1 to i32
    %c0_i32_0 = arith.constant 0 : i32
    %2 = arith.cmpi ne, %1, %c0_i32_0 : i32
    scf.if %2 {
      %cst_26 = arith.constant 0.000000e+00 : f32
      %35 = vector.broadcast %cst_26 : f32 to vector<128x1xf32>
      %c0_27 = arith.constant 0 : index
      %c0_28 = arith.constant 0 : index
      %c0_29 = arith.constant 0 : index
      %36 = vector.load %arg6[%c0_27, %c0_28, %c0_29] : memref<1x128x1xf32, #tpu.memory_space<vmem>>, vector<1x128x1xf32>
      %37 = vector.shape_cast %36 : vector<1x128x1xf32> to vector<128x1xf32>
      %38 = vector.shape_cast %35 : vector<128x1xf32> to vector<1x128x1xf32>
      tpu.vector_store %arg6[%c0_27, %c0_28, %c0_29], %38 {strides = array<i32>} : memref<1x128x1xf32, #tpu.memory_space<vmem>>, vector<1x128x1xf32>,
      %cst_30 = arith.constant 0.000000e+00 : f32
      %39 = vector.broadcast %cst_30 : f32 to vector<128x1xf32>
      %c0_31 = arith.constant 0 : index
      %c0_32 = arith.constant 0 : index
      %c0_33 = arith.constant 0 : index
      %40 = vector.load %arg7[%c0_31, %c0_32, %c0_33] : memref<1x128x1xf32, #tpu.memory_space<vmem>>, vector<1x128x1xf32>
      %41 = vector.shape_cast %40 : vector<1x128x1xf32> to vector<128x1xf32>
      %42 = vector.shape_cast %39 : vector<128x1xf32> to vector<1x128x1xf32>
      tpu.vector_store %arg7[%c0_31, %c0_32, %c0_33], %42 {strides = array<i32>} : memref<1x128x1xf32, #tpu.memory_space<vmem>>, vector<1x128x1xf32>,
    } else {
    }
    %c0 = arith.constant 0 : index
    %c0_1 = arith.constant 0 : index
    %c0_2 = arith.constant 0 : index
    %3 = vector.load %arg2[%c0, %c0_1, %c0_2] : memref<1x4x256xbf16, #tpu.memory_space<vmem>>, vector<1x4x256xbf16>
    %4 = vector.shape_cast %3 : vector<1x4x256xbf16> to vector<4x256xbf16>
    %c0_3 = arith.constant 0 : index
    %c0_4 = arith.constant 0 : index
    %5 = vector.load %arg3[%c0_3, %c0_4] : memref<64x4xbf16, #tpu.memory_space<vmem>>, vector<64x4xbf16>
    %cst = arith.constant dense<0.000000e+00> : vector<64x256xf32>
    %6 = tpu.matmul %5, %4, %cst {dimension_numbers = #tpu.dot_dimension_numbers<[1], [0], [0], [1], [0, 0, 1, 1], [], []>} : vector<64x4xbf16>, vector<4x256xbf16>, vector<64x256xf32> -> vector<64x256xf32>
    %c0_5 = arith.constant 0 : index
    %c0_6 = arith.constant 0 : index
    %7 = vector.load %arg4[%c0_5, %c0_6] : memref<64x1xf32, #tpu.memory_space<vmem>>, vector<64x1xf32>
    %8 = vector.broadcast %7 : vector<64x1xf32> to vector<64x256xf32>
    %9 = arith.addf %6, %8 : vector<64x256xf32>
    %cst_7 = arith.constant 0.000000e+00 : f32
    %10 = vector.broadcast %cst_7 : f32 to vector<64x256xf32>
    %11 = arith.cmpf oge, %9, %10 : vector<64x256xf32>
    %cst_8 = arith.constant 2.000000e-01 : f32
    %12 = vector.broadcast %cst_8 : f32 to vector<64x256xf32>
    %13 = arith.mulf %12, %9 : vector<64x256xf32>
    %14 = arith.select %11, %9, %13 : vector<64x256xi1>, vector<64x256xf32>
    %c0_9 = arith.constant 0 : index
    %c0_10 = arith.constant 0 : index
    %15 = vector.load %arg5[%c0_9, %c0_10] : memref<128x64xbf16, #tpu.memory_space<vmem>>, vector<128x64xbf16>
    %16 = arith.truncf %14 : vector<64x256xf32> to vector<64x256xbf16>
    %cst_11 = arith.constant dense<0.000000e+00> : vector<128x256xf32>
    %17 = tpu.matmul %15, %16, %cst_11 {dimension_numbers = #tpu.dot_dimension_numbers<[1], [0], [0], [1], [0, 0, 1, 1], [], []>} : vector<128x64xbf16>, vector<64x256xbf16>, vector<128x256xf32> -> vector<128x256xf32>
    %c0_12 = arith.constant 0 : index
    %c0_13 = arith.constant 0 : index
    %c0_14 = arith.constant 0 : index
    %18 = vector.load %arg6[%c0_12, %c0_13, %c0_14] : memref<1x128x1xf32, #tpu.memory_space<vmem>>, vector<1x128x1xf32>
    %19 = vector.shape_cast %18 : vector<1x128x1xf32> to vector<128x1xf32>
    %cst_15 = arith.constant dense<0.000000e+00> : vector<128xf32>
    %20 = vector.multi_reduction <add>, %17, %cst_15 [1] : vector<128x256xf32> to vector<128xf32>
    %21 = vector.shape_cast %20 : vector<128xf32> to vector<128x1xf32>
    %22 = arith.addf %19, %21 : vector<128x1xf32>
    %c0_16 = arith.constant 0 : index
    %c0_17 = arith.constant 0 : index
    %c0_18 = arith.constant 0 : index
    %23 = vector.load %arg6[%c0_16, %c0_17, %c0_18] : memref<1x128x1xf32, #tpu.memory_space<vmem>>, vector<1x128x1xf32>
    %24 = vector.shape_cast %23 : vector<1x128x1xf32> to vector<128x1xf32>
    %25 = vector.shape_cast %22 : vector<128x1xf32> to vector<1x128x1xf32>
    tpu.vector_store %arg6[%c0_16, %c0_17, %c0_18], %25 {strides = array<i32>} : memref<1x128x1xf32, #tpu.memory_space<vmem>>, vector<1x128x1xf32>,
    %c0_19 = arith.constant 0 : index
    %c0_20 = arith.constant 0 : index
    %c0_21 = arith.constant 0 : index
    %26 = vector.load %arg7[%c0_19, %c0_20, %c0_21] : memref<1x128x1xf32, #tpu.memory_space<vmem>>, vector<1x128x1xf32>
    %27 = vector.shape_cast %26 : vector<1x128x1xf32> to vector<128x1xf32>
    %28 = arith.mulf %17, %17 : vector<128x256xf32>
    %cst_22 = arith.constant dense<0.000000e+00> : vector<128xf32>
    %29 = vector.multi_reduction <add>, %28, %cst_22 [1] : vector<128x256xf32> to vector<128xf32>
    %30 = vector.shape_cast %29 : vector<128xf32> to vector<128x1xf32>
    %31 = arith.addf %27, %30 : vector<128x1xf32>
    %c0_23 = arith.constant 0 : index
    %c0_24 = arith.constant 0 : index
    %c0_25 = arith.constant 0 : index
    %32 = vector.load %arg7[%c0_23, %c0_24, %c0_25] : memref<1x128x1xf32, #tpu.memory_space<vmem>>, vector<1x128x1xf32>
    %33 = vector.shape_cast %32 : vector<1x128x1xf32> to vector<128x1xf32>
    %34 = vector.shape_cast %31 : vector<128x1xf32> to vector<1x128x1xf32>
    tpu.vector_store %arg7[%c0_23, %c0_24, %c0_25], %34 {strides = array<i32>} : memref<1x128x1xf32, #tpu.memory_space<vmem>>, vector<1x128x1xf32>,
    return
  }
  func.func @transform_0(%arg0: i32, %arg1: i32) -> (i32, i32, i32) {
    %c0_i32 = arith.constant 0 : i32
    %c0_i32_0 = arith.constant 0 : i32
    return %arg0, %c0_i32, %arg1 : i32, i32, i32
  }
  func.func @transform_1(%arg0: i32, %arg1: i32) -> (i32, i32) {
    %c0_i32 = arith.constant 0 : i32
    %c0_i32_0 = arith.constant 0 : i32
    %c0_i32_1 = arith.constant 0 : i32
    return %c0_i32, %c0_i32_0 : i32, i32
  }
  func.func @transform_2(%arg0: i32, %arg1: i32) -> (i32, i32) {
    %c0_i32 = arith.constant 0 : i32
    %c0_i32_0 = arith.constant 0 : i32
    %c0_i32_1 = arith.constant 0 : i32
    return %c0_i32, %c0_i32_0 : i32, i32
  }
  func.func @transform_3(%arg0: i32, %arg1: i32) -> (i32, i32) {
    %c0_i32 = arith.constant 0 : i32
    %c0_i32_0 = arith.constant 0 : i32
    %c0_i32_1 = arith.constant 0 : i32
    return %c0_i32, %c0_i32_0 : i32, i32
  }
  func.func @transform_4(%arg0: i32, %arg1: i32) -> (i32, i32, i32) {
    %c0_i32 = arith.constant 0 : i32
    %c0_i32_0 = arith.constant 0 : i32
    %c0_i32_1 = arith.constant 0 : i32
    return %arg0, %c0_i32, %c0_i32_0 : i32, i32, i32
  }
  func.func @transform_5(%arg0: i32, %arg1: i32) -> (i32, i32, i32) {
    %c0_i32 = arith.constant 0 : i32
    %c0_i32_0 = arith.constant 0 : i32
    %c0_i32_1 = arith.constant 0 : i32
    return %arg0, %c0_i32, %c0_i32_0 : i32, i32, i32
  }
}

</mosaic_0001>

<llo_original>
// kernel: tpu_custom_call.1
$region0: #{tpu_custom_call.1}
  #allocation0 [shape = 'u32[]', space=smem, size = 0x4, offset = 0x4, fixed_abs, tag = 'smem constant byte address 0x4 - core index']
  #allocation1 [shape = 'u32[144,128]{1,0:T(1,128)}', space=vmem, size = 0x12000, scoped, tag = 'internal scratch']
  %s0 = inlined_call_operand.vmem [shape: bf16[2,4,256], index: 0, kind: input, shape index: {}]
  %s1 = inlined_call_operand.vmem [shape: bf16[64,4], index: 1, kind: input, shape index: {}]
  %s2 = inlined_call_operand.vmem [shape: f32[64,1], index: 2, kind: input, shape index: {}]
  %s3 = inlined_call_operand.vmem [shape: bf16[128,64], index: 3, kind: input, shape index: {}]
  %s4 = inlined_call_operand.vmem [shape: f32[2,128,1], index: 4, kind: output, shape index: {0}]
  %s5 = inlined_call_operand.vmem [shape: f32[2,128,1], index: 5, kind: output, shape index: {1}]
  %6 = xla_tuple %s4, %s5
  %s7 = sld [smem:[#allocation0]]
  $region61: #{tpu_custom_call.1} parent=0
    _
  %s9 = ssub.s32 1, %s7
  %s10 = scalar_select 0, %s9, %s7
  loop: start=0, step=1, limit=4
  $region2: #{tpu_custom_call.1} parent=0 // loop_pre_header
    _
  $region3: #{tpu_custom_call.1} parent=0 // loop_header
    %s12 = sphi 0, %s16
    %p13 = scmp.ge.s32.totalorder %s12, 4
    %s19 = sphi 0, %s31
    %s20 = sphi 0, %s27
    %s21 = sphi 0, %s19
    %s22 = sphi 0, %s20
    %s23 = sphi 0, %s21
    %s24 = sphi 0, %s22
    %s36 = sphi 0, %s38
    %s39 = sphi 0, %s36
    %s40 = sphi 0, %s39
    %s56 = sphi 0, %s40
    %s60 = sphi 0, %s60
    %s62 = sphi 0, %s60
    %s63 = sphi 0, %s62
    %s77 = sphi 0, %s63
    %s81 = sphi 0, %s81
    %s83 = sphi 0, %s81
    %s84 = sphi 0, %s83
    %s98 = sphi 0, %s84
    %s102 = sphi 0, %s102
    %s104 = sphi 0, %s102
    %s105 = sphi 0, %s104
    %s119 = sphi 0, %s105
    %s125 = sphi 0, %s127
    %s128 = sphi 0, %s125
    %s129 = sphi 0, %s128
    %s145 = sphi 0, %s129
    %s151 = sphi 0, %s153
    %s154 = sphi 0, %s151
    %s155 = sphi 0, %s154
    %s171 = sphi 0, %s155
  $region4: #{tpu_custom_call.1} parent=0 // loop_header_branch
    %15 = sbr.rel (%p13) target = $region8
  $region5: #{tpu_custom_call.1} parent=0 // loop_body
    %s17 = ssub.s32 %s12, 1
    %s18 = ssub.s32 %s12, 2
    %s25 = sadd.s32 1, %s20
    %p26 = scmp.ge.s32.totalorder %s25, 1
    %s27 = scalar_select %p26, 0, %s25
    %s28 = sadd.s32 1, %s19
    %s29 = scalar_select %p26, %s28, %s19
    %p30 = scmp.ge.s32.totalorder %s29, 2
    %s31 = scalar_select %p30, 0, %s29
    %s32 = ssub.s32 %s19, %s31
    %s33 = ssub.s32 %s20, %s27
    %s34 = sor.u32 %s32, %s33
    %p35 = scmp.eq.s32.totalorder %s34, 0
    %s37 = sadd.s32 %s36, 1
    %s38 = scalar_select %p35, %s36, %s37
    %p41 = pneg %p35
    %p42 = scmp.eq.s32.totalorder %s12, 1
    %p43 = por %p41, %p42
    %p44 = scmp.ne.s32.totalorder %s36, %s39
    %p45 = scmp.eq.s32.totalorder %s12, 0
    %p46 = por %p44, %p45
    %p47 = scmp.ne.s32.totalorder %s36, %s39
    %p48 = scmp.eq.s32.totalorder %s17, 1
    %p49 = por %p47, %p48
    %p50 = scmp.ne.s32.totalorder %s39, %s40
    %p51 = scmp.eq.s32.totalorder %s17, 0
    %p52 = por %p50, %p51
    %p53 = scmp.ne.s32.totalorder %s39, %s40
    %p54 = scmp.eq.s32.totalorder %s18, 1
    %p55 = por %p53, %p54
    %p57 = scmp.ne.s32.totalorder %s40, %s56
    %p58 = scmp.eq.s32.totalorder %s18, 0
    %p59 = por %p57, %p58
    %s61 = sadd.s32 %s60, 1
    %p64 = scmp.eq.s32.totalorder %s12, 1
    %p65 = scmp.ne.s32.totalorder %s60, %s62
    %p66 = scmp.eq.s32.totalorder %s12, 0
    %p67 = por %p65, %p66
    %p68 = scmp.ne.s32.totalorder %s60, %s62
    %p69 = scmp.eq.s32.totalorder %s17, 1
    %p70 = por %p68, %p69
    %p71 = scmp.ne.s32.totalorder %s62, %s63
    %p72 = scmp.eq.s32.totalorder %s17, 0
    %p73 = por %p71, %p72
    %p74 = scmp.ne.s32.totalorder %s62, %s63
    %p75 = scmp.eq.s32.totalorder %s18, 1
    %p76 = por %p74, %p75
    %p78 = scmp.ne.s32.totalorder %s63, %s77
    %p79 = scmp.eq.s32.totalorder %s18, 0
    %p80 = por %p78, %p79
    %s82 = sadd.s32 %s81, 1
    %p85 = scmp.eq.s32.totalorder %s12, 1
    %p86 = scmp.ne.s32.totalorder %s81, %s83
    %p87 = scmp.eq.s32.totalorder %s12, 0
    %p88 = por %p86, %p87
    %p89 = scmp.ne.s32.totalorder %s81, %s83
    %p90 = scmp.eq.s32.totalorder %s17, 1
    %p91 = por %p89, %p90
    %p92 = scmp.ne.s32.totalorder %s83, %s84
    %p93 = scmp.eq.s32.totalorder %s17, 0
    %p94 = por %p92, %p93
    %p95 = scmp.ne.s32.totalorder %s83, %s84
    %p96 = scmp.eq.s32.totalorder %s18, 1
    %p97 = por %p95, %p96
    %p99 = scmp.ne.s32.totalorder %s84, %s98
    %p100 = scmp.eq.s32.totalorder %s18, 0
    %p101 = por %p99, %p100
    %s103 = sadd.s32 %s102, 1
    %p106 = scmp.eq.s32.totalorder %s12, 1
    %p107 = scmp.ne.s32.totalorder %s102, %s104
    %p108 = scmp.eq.s32.totalorder %s12, 0
    %p109 = por %p107, %p108
    %p110 = scmp.ne.s32.totalorder %s102, %s104
    %p111 = scmp.eq.s32.totalorder %s17, 1
    %p112 = por %p110, %p111
    %p113 = scmp.ne.s32.totalorder %s104, %s105
    %p114 = scmp.eq.s32.totalorder %s17, 0
    %p115 = por %p113, %p114
    %p116 = scmp.ne.s32.totalorder %s104, %s105
    %p117 = scmp.eq.s32.totalorder %s18, 1
    %p118 = por %p116, %p117
    %p120 = scmp.ne.s32.totalorder %s105, %s119
    %p121 = scmp.eq.s32.totalorder %s18, 0
    %p122 = por %p120, %p121
    %s123 = ssub.s32 %s19, %s31
    %p124 = scmp.eq.s32.totalorder %s123, 0
    %s126 = sadd.s32 %s125, 1
    %s127 = scalar_select %p124, %s125, %s126
    %p130 = pneg %p124
    %p131 = scmp.eq.s32.totalorder %s12, 1
    %p132 = por %p130, %p131
    %p133 = scmp.ne.s32.totalorder %s125, %s128
    %p134 = scmp.eq.s32.totalorder %s12, 0
    %p135 = por %p133, %p134
    %p136 = scmp.ne.s32.totalorder %s125, %s128
    %p137 = scmp.eq.s32.totalorder %s17, 1
    %p138 = por %p136, %p137
    %p139 = scmp.ne.s32.totalorder %s128, %s129
    %p140 = scmp.eq.s32.totalorder %s17, 0
    %p141 = por %p139, %p140
    %p142 = scmp.ne.s32.totalorder %s128, %s129
    %p143 = scmp.eq.s32.totalorder %s18, 1
    %p144 = por %p142, %p143
    %p146 = scmp.ne.s32.totalorder %s129, %s145
    %p147 = scmp.eq.s32.totalorder %s18, 0
    %p148 = por %p146, %p147
    %s149 = ssub.s32 %s19, %s31
    %p150 = scmp.eq.s32.totalorder %s149, 0
    %s152 = sadd.s32 %s151, 1
    %s153 = scalar_select %p150, %s151, %s152
    %p156 = pneg %p150
    %p157 = scmp.eq.s32.totalorder %s12, 1
    %p158 = por %p156, %p157
    %p159 = scmp.ne.s32.totalorder %s151, %s154
    %p160 = scmp.eq.s32.totalorder %s12, 0
    %p161 = por %p159, %p160
    %p162 = scmp.ne.s32.totalorder %s151, %s154
    %p163 = scmp.eq.s32.totalorder %s17, 1
    %p164 = por %p162, %p163
    %p165 = scmp.ne.s32.totalorder %s154, %s155
    %p166 = scmp.eq.s32.totalorder %s17, 0
    %p167 = por %p165, %p166
    %p168 = scmp.ne.s32.totalorder %s154, %s155
    %p169 = scmp.eq.s32.totalorder %s18, 1
    %p170 = por %p168, %p169
    %p172 = scmp.ne.s32.totalorder %s155, %s171
    %p173 = scmp.eq.s32.totalorder %s18, 0
    %p174 = por %p172, %p173
    %p175 = scmp.le.s32.totalorder 1, %s12
    %p176 = scmp.lt.s32.totalorder %s12, 3
    %p177 = pnand %p175, %p176
    %p178 = pneg %p177
    // Predicated region
    $region9: #{tpu_custom_call.1} parent=5 // pred_check
      _
    $region10: #{tpu_custom_call.1} parent=5 // pred_check_branch
      %180 = sbr.rel (%p177) target = $region12
    $region11: #{tpu_custom_call.1} parent=5 // pred_region
      %s181 = ssub.s32 %s12, 1
      // Predicated region
      $region13: #{tpu_custom_call.1} parent=11 // pred_check
        %p182 = pneg %p73
      $region14: #{tpu_custom_call.1} parent=11 // pred_check_branch
        %184 = sbr.rel (%p182) target = $region16
      $region15: #{tpu_custom_call.1} parent=11 // pred_region
        _
      $region16: #{tpu_custom_call.1} parent=11 // pred_fallthru
        _
      // Predicated region
      $region17: #{tpu_custom_call.1} parent=11 // pred_check
        %p185 = pneg %p94
      $region18: #{tpu_custom_call.1} parent=11 // pred_check_branch
        %187 = sbr.rel (%p185) target = $region20
      $region19: #{tpu_custom_call.1} parent=11 // pred_region
        _
      $region20: #{tpu_custom_call.1} parent=11 // pred_fallthru
        _
      // Predicated region
      $region21: #{tpu_custom_call.1} parent=11 // pred_check
        %p188 = pneg %p115
      $region22: #{tpu_custom_call.1} parent=11 // pred_check_branch
        %190 = sbr.rel (%p188) target = $region24
      $region23: #{tpu_custom_call.1} parent=11 // pred_region
        _
      $region24: #{tpu_custom_call.1} parent=11 // pred_fallthru
        _
    $region12: #{tpu_custom_call.1} parent=5 // pred_fallthru
      _
    %p191 = scmp.lt.s32.totalorder %s12, 2
    // Predicated region
    $region25: #{tpu_custom_call.1} parent=5 // pred_check
      %p192 = pneg %p191
    $region26: #{tpu_custom_call.1} parent=5 // pred_check_branch
      %194 = sbr.rel (%p192) target = $region28
    $region27: #{tpu_custom_call.1} parent=5 // pred_region
      // Predicated region
      $region29: #{tpu_custom_call.1} parent=27 // pred_check
        %p195 = pneg %p46
      $region30: #{tpu_custom_call.1} parent=27 // pred_check_branch
        %197 = sbr.rel (%p195) target = $region32
      $region31: #{tpu_custom_call.1} parent=27 // pred_region
        %s198 = smul.u32 2, %s20
        %p199 = scmp.lt.s32.totalorder %s19, 1
        %s200 = scalar_select %p199, %s19, 1
        %p201 = scmp.lt.s32.totalorder %s198, 1
        %s202 = scalar_select %p201, %s198, 1
        %s203 = smul.addr %s200, 2
        %s204 = sadd.s32 %s202, %s203
        %s205 = smul.addr %s204, 2
        %s206 = scalar_lea.vmem %s0, %s205
        %s207 = smul.u32 2, %s20
      $region32: #{tpu_custom_call.1} parent=27 // pred_fallthru
        _
    $region28: #{tpu_custom_call.1} parent=5 // pred_fallthru
      _
    %p208 = scmp.le.s32.totalorder 1, %s12
    %p209 = scmp.lt.s32.totalorder %s12, 3
    %p210 = pnand %p208, %p209
    %p211 = pneg %p210
    // Predicated region
    $region33: #{tpu_custom_call.1} parent=5 // pred_check
      _
    $region34: #{tpu_custom_call.1} parent=5 // pred_check_branch
      %213 = sbr.rel (%p210) target = $region36
    $region35: #{tpu_custom_call.1} parent=5 // pred_region
      %s214 = ssub.s32 %s12, 1
      %s215 = smul.u32 2, %s22
      %p216 = scmp.lt.s32.totalorder %s21, 1
      %s217 = scalar_select %p216, %s21, 1
      %p218 = scmp.lt.s32.totalorder %s215, 1
      %s219 = scalar_select %p218, %s215, 1
      %s220 = smul.addr %s217, 2
      %s221 = sadd.s32 %s219, %s220
      %s222 = smul.addr %s221, 2
      %s223 = scalar_lea.vmem %s0, %s222
      %p224 = pneg %p52
      %p225 = pneg %p49
      %p226 = pneg %p73
      %p227 = pneg %p70
      %p228 = pneg %p94
      %p229 = pneg %p91
      %p230 = pneg %p115
      %p231 = pneg %p112
      %p232 = pneg %p141
      %p233 = pneg %p138
      %p234 = scmp.lt.s32.totalorder %s21, 1
      %s235 = scalar_select %p234, %s21, 1
      %s236 = smul.addr %s235, 16
      %s237 = smul.addr %s236, 8
      %s238 = scalar_lea.vmem %s4, %s237
      %p239 = pneg %p167
      %p240 = pneg %p164
      %p241 = scmp.lt.s32.totalorder %s21, 1
      %s242 = scalar_select %p241, %s21, 1
      %s243 = smul.addr %s242, 16
      %s244 = smul.addr %s243, 8
      %s245 = scalar_lea.vmem %s5, %s244
      %s246 = smul.u32 2, %s22
      %p247 = scmp.lt.s32.totalorder %s21, 1
      %s248 = scalar_select %p247, %s21, 1
      %p249 = scmp.lt.s32.totalorder %s246, 1
      %s250 = scalar_select %p249, %s246, 1
      %s251 = smul.addr %s248, 2
      %s252 = sadd.s32 %s250, %s251
      %s253 = smul.addr %s252, 2
      %s254 = scalar_lea.vmem %s0, %s253
      %s255 = smul.u32 2, %s22
      %p256 = scmp.lt.s32.totalorder %s21, 1
      %s257 = scalar_select %p256, %s21, 1
      %s258 = smul.addr %s257, 16
      %s259 = smul.addr %s258, 8
      %s260 = scalar_lea.vmem %s4, %s259
      %p261 = scmp.lt.s32.totalorder %s21, 1
      %s262 = scalar_select %p261, %s21, 1
      %s263 = smul.addr %s262, 16
      %s264 = smul.addr %s263, 8
      %s265 = scalar_lea.vmem %s5, %s264
      %p267 = scmp.eq.s32.totalorder %s22, 0
      // Predicated region
      $region37: #{tpu_custom_call.1} parent=35 // pred_check
        %p268 = pneg %p267
      $region38: #{tpu_custom_call.1} parent=35 // pred_check_branch
        %270 = sbr.rel (%p268) target = $region40
      $region39: #{tpu_custom_call.1} parent=35 // pred_region
        %vm271 = vcmask 7168
        %272 = vst.msk [vmem:[%s260] sm:$0xff] %vm271, 0.0
        %273 = vst.msk [vmem:[%s260 + $0x8] sm:$0xff] %vm271, 0.0
        %274 = vst.msk [vmem:[%s260 + $0x10] sm:$0xff] %vm271, 0.0
        %275 = vst.msk [vmem:[%s260 + $0x18] sm:$0xff] %vm271, 0.0
        %276 = vst.msk [vmem:[%s260 + $0x20] sm:$0xff] %vm271, 0.0
        %277 = vst.msk [vmem:[%s260 + $0x28] sm:$0xff] %vm271, 0.0
        %278 = vst.msk [vmem:[%s260 + $0x30] sm:$0xff] %vm271, 0.0
        %279 = vst.msk [vmem:[%s260 + $0x38] sm:$0xff] %vm271, 0.0
        %280 = vst.msk [vmem:[%s260 + $0x40] sm:$0xff] %vm271, 0.0
        %281 = vst.msk [vmem:[%s260 + $0x48] sm:$0xff] %vm271, 0.0
        %282 = vst.msk [vmem:[%s260 + $0x50] sm:$0xff] %vm271, 0.0
        %283 = vst.msk [vmem:[%s260 + $0x58] sm:$0xff] %vm271, 0.0
        %284 = vst.msk [vmem:[%s260 + $0x60] sm:$0xff] %vm271, 0.0
        %285 = vst.msk [vmem:[%s260 + $0x68] sm:$0xff] %vm271, 0.0
        %286 = vst.msk [vmem:[%s260 + $0x70] sm:$0xff] %vm271, 0.0
        %287 = vst.msk [vmem:[%s260 + $0x78] sm:$0xff] %vm271, 0.0
        %288 = vst.msk [vmem:[%s265] sm:$0xff] %vm271, 0.0
        %289 = vst.msk [vmem:[%s265 + $0x8] sm:$0xff] %vm271, 0.0
        %290 = vst.msk [vmem:[%s265 + $0x10] sm:$0xff] %vm271, 0.0
        %291 = vst.msk [vmem:[%s265 + $0x18] sm:$0xff] %vm271, 0.0
        %292 = vst.msk [vmem:[%s265 + $0x20] sm:$0xff] %vm271, 0.0
        %293 = vst.msk [vmem:[%s265 + $0x28] sm:$0xff] %vm271, 0.0
        %294 = vst.msk [vmem:[%s265 + $0x30] sm:$0xff] %vm271, 0.0
        %295 = vst.msk [vmem:[%s265 + $0x38] sm:$0xff] %vm271, 0.0
        %296 = vst.msk [vmem:[%s265 + $0x40] sm:$0xff] %vm271, 0.0
        %297 = vst.msk [vmem:[%s265 + $0x48] sm:$0xff] %vm271, 0.0
        %298 = vst.msk [vmem:[%s265 + $0x50] sm:$0xff] %vm271, 0.0
        %299 = vst.msk [vmem:[%s265 + $0x58] sm:$0xff] %vm271, 0.0
        %300 = vst.msk [vmem:[%s265 + $0x60] sm:$0xff] %vm271, 0.0
        %301 = vst.msk [vmem:[%s265 + $0x68] sm:$0xff] %vm271, 0.0
        %302 = vst.msk [vmem:[%s265 + $0x70] sm:$0xff] %vm271, 0.0
        %303 = vst.msk [vmem:[%s265 + $0x78] sm:$0xff] %vm271, 0.0
      $region40: #{tpu_custom_call.1} parent=35 // pred_fallthru
        _
      %v304 = vld [vmem:[%s254] sm:$0xf]
      %v305 = vld [vmem:[%s1] sm:$0xf]
      %v306 = vld [vmem:[%s1 + $0x4] sm:$0xf]
      %v307 = vld [vmem:[%s1 + $0x8] sm:$0xf]
      %v308 = vld [vmem:[%s1 + $0xc] sm:$0xf]
      %v309 = vld [vmem:[%s1 + $0x10] sm:$0xf]
      %v310 = vld [vmem:[%s1 + $0x14] sm:$0xf]
      %v311 = vld [vmem:[%s1 + $0x18] sm:$0xf]
      %v312 = vld [vmem:[%s1 + $0x1c] sm:$0xf]
      %v313 = vld [vmem:[%s2] sm:$0xff]
      %v314 = vld [vmem:[%s2 + $0x8] sm:$0xff]
      %v315 = vld [vmem:[%s2 + $0x10] sm:$0xff]
      %v316 = vld [vmem:[%s2 + $0x18] sm:$0xff]
      %v317 = vld [vmem:[%s2 + $0x20] sm:$0xff]
      %v318 = vld [vmem:[%s2 + $0x28] sm:$0xff]
      %v319 = vld [vmem:[%s2 + $0x30] sm:$0xff]
      %v320 = vld [vmem:[%s2 + $0x38] sm:$0xff]
      %322 = vset.pattern.permute.xlu0 0
      %323 = vperm.xlu0 %322, %v313
      %v324 = vpop.permute.xlu0 %323
      %327 = vset.pattern.permute.xlu0 0
      %328 = vperm.xlu0 %327, %v314
      %v329 = vpop.permute.xlu0 %328
      %332 = vset.pattern.permute.xlu0 0
      %333 = vperm.xlu0 %332, %v315
      %v334 = vpop.permute.xlu0 %333
      %337 = vset.pattern.permute.xlu0 0
      %338 = vperm.xlu0 %337, %v316
      %v339 = vpop.permute.xlu0 %338
      %342 = vset.pattern.permute.xlu0 0
      %343 = vperm.xlu0 %342, %v317
      %v344 = vpop.permute.xlu0 %343
      %347 = vset.pattern.permute.xlu0 0
      %348 = vperm.xlu0 %347, %v318
      %v349 = vpop.permute.xlu0 %348
      %352 = vset.pattern.permute.xlu0 0
      %353 = vperm.xlu0 %352, %v319
      %v354 = vpop.permute.xlu0 %353
      %357 = vset.pattern.permute.xlu0 0
      %358 = vperm.xlu0 %357, %v320
      %v359 = vpop.permute.xlu0 %358
      %v369 = vunpack.c.l.b16 %v305
      %v370 = vunpack.c.l.b16 %v306
      %v371 = vunpack.c.l.b16 %v307
      %v372 = vunpack.c.l.b16 %v308
      %v373 = vunpack.c.l.b16 %v309
      %v374 = vunpack.c.l.b16 %v310
      %v375 = vunpack.c.l.b16 %v311
      %v376 = vunpack.c.l.b16 %v312
      %v377 = vpack.c.b16 %v370, %v369
      %v378 = vpack.c.b16 %v372, %v371
      %v379 = vpack.c.b16 %v374, %v373
      %v380 = vpack.c.b16 %v376, %v375
      %v383 = vunpack.c.l.s4 1983009808
      %v384 = vunpack.c.0.s8 %v383
      %v385 = vlaneseq
      %v386 = vshrl.u32 %v385, 7
      %v387 = vsub.s32 %v384, %v386
      %v388 = vrot.slane %v304, %v387
      %v389 = vcombine.high %v388, %v388
      %vm390 = vcmask 31744
      %v392 = vsel %vm390, %v377, 0
      %v395 = vsel %vm390, %v378, 0
      %v398 = vsel %vm390, %v379, 0
      %v401 = vsel %vm390, %v380, 0
      %vm403 = vcmask 1041408
      %v405 = vsel %vm403, %v388, 0
      %v408 = vsel %vm403, %v389, 0
      %410 = vmatprep.subr.bf16.mxu0 %v408
      %411 = vmatpush1.bf16.msra.mxu0 %v405
      %412 = vmatprep.subr.bf16.mxu0 0
      %413 = vmatpush1.bf16.msra.mxu0 0
      %414 = vmatprep.subr.bf16.mxu0 0
      %415 = vmatpush1.bf16.msra.mxu0 0
      %416 = vmatprep.subr.bf16.mxu0 0
      %417 = vmatpush1.bf16.msra.mxu0 0
      %418 = vmatprep.subr.bf16.mxu0 0
      %419 = vmatpush1.bf16.msra.mxu0 0
      %420 = vmatprep.subr.bf16.mxu0 0
      %421 = vmatpush1.bf16.msra.mxu0 0
      %422 = vmatprep.subr.bf16.mxu0 0
      %423 = vmatpush1.bf16.msra.mxu0 0
      %424 = vmatprep.subr.bf16.mxu0 0
      %425 = vmatpush1.bf16.msra.mxu0 0
      %426 = vmatprep.subr.bf16.mxu0 0
      %427 = vmatpush1.bf16.msra.mxu0 0
      %428 = vmatprep.subr.bf16.mxu0 0
      %429 = vmatpush1.bf16.msra.mxu0 0
      %430 = vmatprep.subr.bf16.mxu0 0
      %431 = vmatpush1.bf16.msra.mxu0 0
      %432 = vmatprep.subr.bf16.mxu0 0
      %433 = vmatpush1.bf16.msra.mxu0 0
      %434 = vmatprep.subr.bf16.mxu0 0
      %435 = vmatpush1.bf16.msra.mxu0 0
      %436 = vmatprep.subr.bf16.mxu0 0
      %437 = vmatpush1.bf16.msra.mxu0 0
      %438 = vmatprep.subr.bf16.mxu0 0
      %439 = vmatpush1.bf16.msra.mxu0 0
      %440 = vmatprep.subr.bf16.mxu0 0
      %441 = vmatpush1.bf16.msra.mxu0 0
      %442 = vmatprep.mubr.bf16.mxu0 0
      %443 = vmatmul.mubr.bf16.gmra.mrb[0].mxu0 %v392
      %v444 = vpop.f32.mrb[0].mxu0
      %v445 = vadd.f32 %v324, %v444
      %v446 = vpop.f32.mrb[0].mxu0
      %v447 = vadd.f32 %v324, %v446
      %v448 = vpop.f32.mrb[0].mxu0
      %v449 = vadd.f32 %v329, %v448
      %v450 = vpop.f32.mrb[0].mxu0
      %v451 = vadd.f32 %v329, %v450
      %452 = vmatprep.mubr.bf16.mxu0 0
      %453 = vmatmul.mubr.bf16.gmra.mrb[0].mxu0 %v395
      %v454 = vpop.f32.mrb[0].mxu0
      %v455 = vadd.f32 %v334, %v454
      %v456 = vpop.f32.mrb[0].mxu0
      %v457 = vadd.f32 %v334, %v456
      %v458 = vpop.f32.mrb[0].mxu0
      %v459 = vadd.f32 %v339, %v458
      %v460 = vpop.f32.mrb[0].mxu0
      %v461 = vadd.f32 %v339, %v460
      %462 = vmatprep.mubr.bf16.mxu0 0
      %463 = vmatmul.mubr.bf16.gmra.mrb[0].mxu0 %v398
      %v464 = vpop.f32.mrb[0].mxu0
      %v465 = vadd.f32 %v344, %v464
      %v466 = vpop.f32.mrb[0].mxu0
      %v467 = vadd.f32 %v344, %v466
      %v468 = vpop.f32.mrb[0].mxu0
      %v469 = vadd.f32 %v349, %v468
      %v470 = vpop.f32.mrb[0].mxu0
      %v471 = vadd.f32 %v349, %v470
      %472 = vmatprep.mubr.bf16.mxu0 0
      %473 = vmatmul.mubr.bf16.gmra.mrb[0].mxu0 %v401
      %v474 = vpop.f32.mrb[0].mxu0
      %v475 = vadd.f32 %v354, %v474
      %v476 = vpop.f32.mrb[0].mxu0
      %v477 = vadd.f32 %v354, %v476
      %v478 = vpop.f32.mrb[0].mxu0
      %v479 = vadd.f32 %v359, %v478
      %v480 = vpop.f32.mrb[0].mxu0
      %v481 = vadd.f32 %v359, %v480
      %482 = vdwg.mxu0
      %vm483 = vcmp.ge.f32.partialorder %v445, 0.0
      %vm484 = vcmp.ge.f32.partialorder %v447, 0.0
      %vm485 = vcmp.ge.f32.partialorder %v449, 0.0
      %vm486 = vcmp.ge.f32.partialorder %v451, 0.0
      %vm487 = vcmp.ge.f32.partialorder %v455, 0.0
      %vm488 = vcmp.ge.f32.partialorder %v457, 0.0
      %vm489 = vcmp.ge.f32.partialorder %v459, 0.0
      %vm490 = vcmp.ge.f32.partialorder %v461, 0.0
      %vm491 = vcmp.ge.f32.partialorder %v465, 0.0
      %vm492 = vcmp.ge.f32.partialorder %v467, 0.0
      %vm493 = vcmp.ge.f32.partialorder %v469, 0.0
      %vm494 = vcmp.ge.f32.partialorder %v471, 0.0
      %vm495 = vcmp.ge.f32.partialorder %v475, 0.0
      %vm496 = vcmp.ge.f32.partialorder %v477, 0.0
      %vm497 = vcmp.ge.f32.partialorder %v479, 0.0
      %vm498 = vcmp.ge.f32.partialorder %v481, 0.0
      %v499 = vmul.f32 %v445, 0.2
      %v500 = vmul.f32 %v447, 0.2
      %v501 = vmul.f32 %v449, 0.2
      %v502 = vmul.f32 %v451, 0.2
      %v503 = vmul.f32 %v455, 0.2
      %v504 = vmul.f32 %v457, 0.2
      %v505 = vmul.f32 %v459, 0.2
      %v506 = vmul.f32 %v461, 0.2
      %v507 = vmul.f32 %v465, 0.2
      %v508 = vmul.f32 %v467, 0.2
      %v509 = vmul.f32 %v469, 0.2
      %v510 = vmul.f32 %v471, 0.2
      %v511 = vmul.f32 %v475, 0.2
      %v512 = vmul.f32 %v477, 0.2
      %v513 = vmul.f32 %v479, 0.2
      %v514 = vmul.f32 %v481, 0.2
      %v515 = vsel %vm483, %v445, %v499
      %v516 = vsel %vm484, %v447, %v500
      %v517 = vsel %vm485, %v449, %v501
      %v518 = vsel %vm486, %v451, %v502
      %v519 = vsel %vm487, %v455, %v503
      %v520 = vsel %vm488, %v457, %v504
      %v521 = vsel %vm489, %v459, %v505
      %v522 = vsel %vm490, %v461, %v506
      %v523 = vsel %vm491, %v465, %v507
      %v524 = vsel %vm492, %v467, %v508
      %v525 = vsel %vm493, %v469, %v509
      %v526 = vsel %vm494, %v471, %v510
      %v527 = vsel %vm495, %v475, %v511
      %v528 = vsel %vm496, %v477, %v512
      %v529 = vsel %vm497, %v479, %v513
      %v530 = vsel %vm498, %v481, %v514
      %v531 = vld [vmem:[%s3] sm:$0xf]
      %v532 = vld [vmem:[%s3 + $0x4] sm:$0xf]
      %v533 = vld [vmem:[%s3 + $0x8] sm:$0xf]
      %v534 = vld [vmem:[%s3 + $0xc] sm:$0xf]
      %v535 = vld [vmem:[%s3 + $0x10] sm:$0xf]
      %v536 = vld [vmem:[%s3 + $0x14] sm:$0xf]
      %v537 = vld [vmem:[%s3 + $0x18] sm:$0xf]
      %v538 = vld [vmem:[%s3 + $0x1c] sm:$0xf]
      %v539 = vld [vmem:[%s3 + $0x20] sm:$0xf]
      %v540 = vld [vmem:[%s3 + $0x24] sm:$0xf]
      %v541 = vld [vmem:[%s3 + $0x28] sm:$0xf]
      %v542 = vld [vmem:[%s3 + $0x2c] sm:$0xf]
      %v543 = vld [vmem:[%s3 + $0x30] sm:$0xf]
      %v544 = vld [vmem:[%s3 + $0x34] sm:$0xf]
      %v545 = vld [vmem:[%s3 + $0x38] sm:$0xf]
      %v546 = vld [vmem:[%s3 + $0x3c] sm:$0xf]
      %v547 = vpack.c.bf16 %v517, %v515
      %v548 = vpack.c.bf16 %v518, %v516
      %v549 = vpack.c.bf16 %v521, %v519
      %v550 = vpack.c.bf16 %v522, %v520
      %v551 = vpack.c.bf16 %v525, %v523
      %v552 = vpack.c.bf16 %v526, %v524
      %v553 = vpack.c.bf16 %v529, %v527
      %v554 = vpack.c.bf16 %v530, %v528
      %v571 = vunpack.c.l.b16 %v531
      %v572 = vunpack.c.l.b16 %v532
      %v573 = vunpack.c.l.b16 %v533
      %v574 = vunpack.c.l.b16 %v534
      %v575 = vunpack.c.l.b16 %v535
      %v576 = vunpack.c.l.b16 %v536
      %v577 = vunpack.c.l.b16 %v537
      %v578 = vunpack.c.l.b16 %v538
      %v579 = vunpack.c.l.b16 %v539
      %v580 = vunpack.c.l.b16 %v540
      %v581 = vunpack.c.l.b16 %v541
      %v582 = vunpack.c.l.b16 %v542
      %v583 = vunpack.c.l.b16 %v543
      %v584 = vunpack.c.l.b16 %v544
      %v585 = vunpack.c.l.b16 %v545
      %v586 = vunpack.c.l.b16 %v546
      %v587 = vpack.c.b16 %v572, %v571
      %v588 = vpack.c.b16 %v574, %v573
      %v589 = vpack.c.b16 %v576, %v575
      %v590 = vpack.c.b16 %v578, %v577
      %v591 = vpack.c.b16 %v580, %v579
      %v592 = vpack.c.b16 %v582, %v581
      %v593 = vpack.c.b16 %v584, %v583
      %v594 = vpack.c.b16 %v586, %v585
      %vm595 = vcmask 523264
      %v597 = vsel %vm595, %v587, 0
      %v600 = vsel %vm595, %v588, 0
      %v603 = vsel %vm595, %v589, 0
      %v606 = vsel %vm595, %v590, 0
      %v609 = vsel %vm595, %v591, 0
      %v612 = vsel %vm595, %v592, 0
      %v615 = vsel %vm595, %v593, 0
      %v618 = vsel %vm595, %v594, 0
      %620 = vmatprep.subr.bf16.mxu0 %v548
      %621 = vmatpush1.bf16.msra.mxu0 %v547
      %622 = vmatprep.subr.bf16.mxu0 %v550
      %623 = vmatpush1.bf16.msra.mxu0 %v549
      %624 = vmatprep.subr.bf16.mxu0 %v552
      %625 = vmatpush1.bf16.msra.mxu0 %v551
      %626 = vmatprep.subr.bf16.mxu0 %v554
      %627 = vmatpush1.bf16.msra.mxu0 %v553
      %628 = vmatprep.subr.bf16.mxu0 0
      %629 = vmatpush1.bf16.msra.mxu0 0
      %630 = vmatprep.subr.bf16.mxu0 0
      %631 = vmatpush1.bf16.msra.mxu0 0
      %632 = vmatprep.subr.bf16.mxu0 0
      %633 = vmatpush1.bf16.msra.mxu0 0
      %634 = vmatprep.subr.bf16.mxu0 0
      %635 = vmatpush1.bf16.msra.mxu0 0
      %636 = vmatprep.subr.bf16.mxu0 0
      %637 = vmatpush1.bf16.msra.mxu0 0
      %638 = vmatprep.subr.bf16.mxu0 0
      %639 = vmatpush1.bf16.msra.mxu0 0
      %640 = vmatprep.subr.bf16.mxu0 0
      %641 = vmatpush1.bf16.msra.mxu0 0
      %642 = vmatprep.subr.bf16.mxu0 0
      %643 = vmatpush1.bf16.msra.mxu0 0
      %644 = vmatprep.subr.bf16.mxu0 0
      %645 = vmatpush1.bf16.msra.mxu0 0
      %646 = vmatprep.subr.bf16.mxu0 0
      %647 = vmatpush1.bf16.msra.mxu0 0
      %648 = vmatprep.subr.bf16.mxu0 0
      %649 = vmatpush1.bf16.msra.mxu0 0
      %650 = vmatprep.subr.bf16.mxu0 0
      %651 = vmatpush1.bf16.msra.mxu0 0
      %652 = vmatprep.mubr.bf16.mxu0 0
      %653 = vmatmul.mubr.bf16.gmra.mrb[0].mxu0 %v597
      %v654 = vpop.f32.mrb[0].mxu0
      %v655 = vadd.f32 0.0, %v654
      %v656 = vpop.f32.mrb[0].mxu0
      %v657 = vadd.f32 0.0, %v656
      %v658 = vpop.f32.mrb[0].mxu0
      %v659 = vadd.f32 0.0, %v658
      %v660 = vpop.f32.mrb[0].mxu0
      %v661 = vadd.f32 0.0, %v660
      %662 = vmatprep.mubr.bf16.mxu0 0
      %663 = vmatmul.mubr.bf16.gmra.mrb[0].mxu0 %v600
      %v664 = vpop.f32.mrb[0].mxu0
      %v665 = vadd.f32 0.0, %v664
      %v666 = vpop.f32.mrb[0].mxu0
      %v667 = vadd.f32 0.0, %v666
      %v668 = vpop.f32.mrb[0].mxu0
      %v669 = vadd.f32 0.0, %v668
      %v670 = vpop.f32.mrb[0].mxu0
      %v671 = vadd.f32 0.0, %v670
      %672 = vmatprep.mubr.bf16.mxu0 0
      %673 = vmatmul.mubr.bf16.gmra.mrb[0].mxu0 %v603
      %v674 = vpop.f32.mrb[0].mxu0
      %v675 = vadd.f32 0.0, %v674
      %v676 = vpop.f32.mrb[0].mxu0
      %v677 = vadd.f32 0.0, %v676
      %v678 = vpop.f32.mrb[0].mxu0
      %v679 = vadd.f32 0.0, %v678
      %v680 = vpop.f32.mrb[0].mxu0
      %v681 = vadd.f32 0.0, %v680
      %682 = vmatprep.mubr.bf16.mxu0 0
      %683 = vmatmul.mubr.bf16.gmra.mrb[0].mxu0 %v606
      %v684 = vpop.f32.mrb[0].mxu0
      %v685 = vadd.f32 0.0, %v684
      %v686 = vpop.f32.mrb[0].mxu0
      %v687 = vadd.f32 0.0, %v686
      %v688 = vpop.f32.mrb[0].mxu0
      %v689 = vadd.f32 0.0, %v688
      %v690 = vpop.f32.mrb[0].mxu0
      %v691 = vadd.f32 0.0, %v690
      %692 = vmatprep.mubr.bf16.mxu0 0
      %693 = vmatmul.mubr.bf16.gmra.mrb[0].mxu0 %v609
      %v694 = vpop.f32.mrb[0].mxu0
      %v695 = vadd.f32 0.0, %v694
      %v696 = vpop.f32.mrb[0].mxu0
      %v697 = vadd.f32 0.0, %v696
      %v698 = vpop.f32.mrb[0].mxu0
      %v699 = vadd.f32 0.0, %v698
      %v700 = vpop.f32.mrb[0].mxu0
      %v701 = vadd.f32 0.0, %v700
      %702 = vmatprep.mubr.bf16.mxu0 0
      %703 = vmatmul.mubr.bf16.gmra.mrb[0].mxu0 %v612
      %v704 = vpop.f32.mrb[0].mxu0
      %v705 = vadd.f32 0.0, %v704
      %v706 = vpop.f32.mrb[0].mxu0
      %v707 = vadd.f32 0.0, %v706
      %v708 = vpop.f32.mrb[0].mxu0
      %v709 = vadd.f32 0.0, %v708
      %v710 = vpop.f32.mrb[0].mxu0
      %v711 = vadd.f32 0.0, %v710
      %712 = vmatprep.mubr.bf16.mxu0 0
      %713 = vmatmul.mubr.bf16.gmra.mrb[0].mxu0 %v615
      %v714 = vpop.f32.mrb[0].mxu0
      %v715 = vadd.f32 0.0, %v714
      %v716 = vpop.f32.mrb[0].mxu0
      %v717 = vadd.f32 0.0, %v716
      %v718 = vpop.f32.mrb[0].mxu0
      %v719 = vadd.f32 0.0, %v718
      %v720 = vpop.f32.mrb[0].mxu0
      %v721 = vadd.f32 0.0, %v720
      %722 = vmatprep.mubr.bf16.mxu0 0
      %723 = vmatmul.mubr.bf16.gmra.mrb[0].mxu0 %v618
      %v724 = vpop.f32.mrb[0].mxu0
      %v725 = vadd.f32 0.0, %v724
      %v726 = vpop.f32.mrb[0].mxu0
      %v727 = vadd.f32 0.0, %v726
      %v728 = vpop.f32.mrb[0].mxu0
      %v729 = vadd.f32 0.0, %v728
      %v730 = vpop.f32.mrb[0].mxu0
      %v731 = vadd.f32 0.0, %v730
      %732 = vdwg.mxu0
      %v733 = vld [vmem:[%s260] sm:$0xff]
      %v734 = vld [vmem:[%s260 + $0x8] sm:$0xff]
      %v735 = vld [vmem:[%s260 + $0x10] sm:$0xff]
      %v736 = vld [vmem:[%s260 + $0x18] sm:$0xff]
      %v737 = vld [vmem:[%s260 + $0x20] sm:$0xff]
      %v738 = vld [vmem:[%s260 + $0x28] sm:$0xff]
      %v739 = vld [vmem:[%s260 + $0x30] sm:$0xff]
      %v740 = vld [vmem:[%s260 + $0x38] sm:$0xff]
      %v741 = vld [vmem:[%s260 + $0x40] sm:$0xff]
      %v742 = vld [vmem:[%s260 + $0x48] sm:$0xff]
      %v743 = vld [vmem:[%s260 + $0x50] sm:$0xff]
      %v744 = vld [vmem:[%s260 + $0x58] sm:$0xff]
      %v745 = vld [vmem:[%s260 + $0x60] sm:$0xff]
      %v746 = vld [vmem:[%s260 + $0x68] sm:$0xff]
      %v747 = vld [vmem:[%s260 + $0x70] sm:$0xff]
      %v748 = vld [vmem:[%s260 + $0x78] sm:$0xff]
      %v749 = vadd.f32 %v655, %v657
      %750 = vadd.xlane.f32.xlu0 %v749
      %v751 = vpop.xlane.xlu0 %750
      %v752 = vadd.f32 %v659, %v661
      %753 = vadd.xlane.f32.xlu0 %v752
      %v754 = vpop.xlane.xlu0 %753
      %v755 = vadd.f32 %v665, %v667
      %756 = vadd.xlane.f32.xlu0 %v755
      %v757 = vpop.xlane.xlu0 %756
      %v758 = vadd.f32 %v669, %v671
      %759 = vadd.xlane.f32.xlu0 %v758
      %v760 = vpop.xlane.xlu0 %759
      %v761 = vadd.f32 %v675, %v677
      %762 = vadd.xlane.f32.xlu0 %v761
      %v763 = vpop.xlane.xlu0 %762
      %v764 = vadd.f32 %v679, %v681
      %765 = vadd.xlane.f32.xlu0 %v764
      %v766 = vpop.xlane.xlu0 %765
      %v767 = vadd.f32 %v685, %v687
      %768 = vadd.xlane.f32.xlu0 %v767
      %v769 = vpop.xlane.xlu0 %768
      %v770 = vadd.f32 %v689, %v691
      %771 = vadd.xlane.f32.xlu0 %v770
      %v772 = vpop.xlane.xlu0 %771
      %v773 = vadd.f32 %v695, %v697
      %774 = vadd.xlane.f32.xlu0 %v773
      %v775 = vpop.xlane.xlu0 %774
      %v776 = vadd.f32 %v699, %v701
      %777 = vadd.xlane.f32.xlu0 %v776
      %v778 = vpop.xlane.xlu0 %777
      %v779 = vadd.f32 %v705, %v707
      %780 = vadd.xlane.f32.xlu0 %v779
      %v781 = vpop.xlane.xlu0 %780
      %v782 = vadd.f32 %v709, %v711
      %783 = vadd.xlane.f32.xlu0 %v782
      %v784 = vpop.xlane.xlu0 %783
      %v785 = vadd.f32 %v715, %v717
      %786 = vadd.xlane.f32.xlu0 %v785
      %v787 = vpop.xlane.xlu0 %786
      %v788 = vadd.f32 %v719, %v721
      %789 = vadd.xlane.f32.xlu0 %v788
      %v790 = vpop.xlane.xlu0 %789
      %v791 = vadd.f32 %v725, %v727
      %792 = vadd.xlane.f32.xlu0 %v791
      %v793 = vpop.xlane.xlu0 %792
      %v794 = vadd.f32 %v729, %v731
      %795 = vadd.xlane.f32.xlu0 %v794
      %v796 = vpop.xlane.xlu0 %795
      %v797 = vadd.f32 %v733, %v751
      %v798 = vadd.f32 %v734, %v754
      %v799 = vadd.f32 %v735, %v757
      %v800 = vadd.f32 %v736, %v760
      %v801 = vadd.f32 %v737, %v763
      %v802 = vadd.f32 %v738, %v766
      %v803 = vadd.f32 %v739, %v769
      %v804 = vadd.f32 %v740, %v772
      %v805 = vadd.f32 %v741, %v775
      %v806 = vadd.f32 %v742, %v778
      %v807 = vadd.f32 %v743, %v781
      %v808 = vadd.f32 %v744, %v784
      %v809 = vadd.f32 %v745, %v787
      %v810 = vadd.f32 %v746, %v790
      %v811 = vadd.f32 %v747, %v793
      %v812 = vadd.f32 %v748, %v796
      %vm813 = vcmask 7168
      %814 = vst.msk [vmem:[%s260] sm:$0xff] %vm813, %v797
      %815 = vst.msk [vmem:[%s260 + $0x8] sm:$0xff] %vm813, %v798
      %816 = vst.msk [vmem:[%s260 + $0x10] sm:$0xff] %vm813, %v799
      %817 = vst.msk [vmem:[%s260 + $0x18] sm:$0xff] %vm813, %v800
      %818 = vst.msk [vmem:[%s260 + $0x20] sm:$0xff] %vm813, %v801
      %819 = vst.msk [vmem:[%s260 + $0x28] sm:$0xff] %vm813, %v802
      %820 = vst.msk [vmem:[%s260 + $0x30] sm:$0xff] %vm813, %v803
      %821 = vst.msk [vmem:[%s260 + $0x38] sm:$0xff] %vm813, %v804
      %822 = vst.msk [vmem:[%s260 + $0x40] sm:$0xff] %vm813, %v805
      %823 = vst.msk [vmem:[%s260 + $0x48] sm:$0xff] %vm813, %v806
      %824 = vst.msk [vmem:[%s260 + $0x50] sm:$0xff] %vm813, %v807
      %825 = vst.msk [vmem:[%s260 + $0x58] sm:$0xff] %vm813, %v808
      %826 = vst.msk [vmem:[%s260 + $0x60] sm:$0xff] %vm813, %v809
      %827 = vst.msk [vmem:[%s260 + $0x68] sm:$0xff] %vm813, %v810
      %828 = vst.msk [vmem:[%s260 + $0x70] sm:$0xff] %vm813, %v811
      %829 = vst.msk [vmem:[%s260 + $0x78] sm:$0xff] %vm813, %v812
      %v830 = vld [vmem:[%s265] sm:$0xff]
      %v831 = vld [vmem:[%s265 + $0x8] sm:$0xff]
      %v832 = vld [vmem:[%s265 + $0x10] sm:$0xff]
      %v833 = vld [vmem:[%s265 + $0x18] sm:$0xff]
      %v834 = vld [vmem:[%s265 + $0x20] sm:$0xff]
      %v835 = vld [vmem:[%s265 + $0x28] sm:$0xff]
      %v836 = vld [vmem:[%s265 + $0x30] sm:$0xff]
      %v837 = vld [vmem:[%s265 + $0x38] sm:$0xff]
      %v838 = vld [vmem:[%s265 + $0x40] sm:$0xff]
      %v839 = vld [vmem:[%s265 + $0x48] sm:$0xff]
      %v840 = vld [vmem:[%s265 + $0x50] sm:$0xff]
      %v841 = vld [vmem:[%s265 + $0x58] sm:$0xff]
      %v842 = vld [vmem:[%s265 + $0x60] sm:$0xff]
      %v843 = vld [vmem:[%s265 + $0x68] sm:$0xff]
      %v844 = vld [vmem:[%s265 + $0x70] sm:$0xff]
      %v845 = vld [vmem:[%s265 + $0x78] sm:$0xff]
      %v846 = vmul.f32 %v655, %v655
      %v847 = vmul.f32 %v657, %v657
      %v848 = vmul.f32 %v659, %v659
      %v849 = vmul.f32 %v661, %v661
      %v850 = vmul.f32 %v665, %v665
      %v851 = vmul.f32 %v667, %v667
      %v852 = vmul.f32 %v669, %v669
      %v853 = vmul.f32 %v671, %v671
      %v854 = vmul.f32 %v675, %v675
      %v855 = vmul.f32 %v677, %v677
      %v856 = vmul.f32 %v679, %v679
      %v857 = vmul.f32 %v681, %v681
      %v858 = vmul.f32 %v685, %v685
      %v859 = vmul.f32 %v687, %v687
      %v860 = vmul.f32 %v689, %v689
      %v861 = vmul.f32 %v691, %v691
      %v862 = vmul.f32 %v695, %v695
      %v863 = vmul.f32 %v697, %v697
      %v864 = vmul.f32 %v699, %v699
      %v865 = vmul.f32 %v701, %v701
      %v866 = vmul.f32 %v705, %v705
      %v867 = vmul.f32 %v707, %v707
      %v868 = vmul.f32 %v709, %v709
      %v869 = vmul.f32 %v711, %v711
      %v870 = vmul.f32 %v715, %v715
      %v871 = vmul.f32 %v717, %v717
      %v872 = vmul.f32 %v719, %v719
      %v873 = vmul.f32 %v721, %v721
      %v874 = vmul.f32 %v725, %v725
      %v875 = vmul.f32 %v727, %v727
      %v876 = vmul.f32 %v729, %v729
      %v877 = vmul.f32 %v731, %v731
      %v878 = vadd.f32 %v846, %v847
      %879 = vadd.xlane.f32.xlu0 %v878
      %v880 = vpop.xlane.xlu0 %879
      %v881 = vadd.f32 %v848, %v849
      %882 = vadd.xlane.f32.xlu0 %v881
      %v883 = vpop.xlane.xlu0 %882
      %v884 = vadd.f32 %v850, %v851
      %885 = vadd.xlane.f32.xlu0 %v884
      %v886 = vpop.xlane.xlu0 %885
      %v887 = vadd.f32 %v852, %v853
      %888 = vadd.xlane.f32.xlu0 %v887
      %v889 = vpop.xlane.xlu0 %888
      %v890 = vadd.f32 %v854, %v855
      %891 = vadd.xlane.f32.xlu0 %v890
      %v892 = vpop.xlane.xlu0 %891
      %v893 = vadd.f32 %v856, %v857
      %894 = vadd.xlane.f32.xlu0 %v893
      %v895 = vpop.xlane.xlu0 %894
      %v896 = vadd.f32 %v858, %v859
      %897 = vadd.xlane.f32.xlu0 %v896
      %v898 = vpop.xlane.xlu0 %897
      %v899 = vadd.f32 %v860, %v861
      %900 = vadd.xlane.f32.xlu0 %v899
      %v901 = vpop.xlane.xlu0 %900
      %v902 = vadd.f32 %v862, %v863
      %903 = vadd.xlane.f32.xlu0 %v902
      %v904 = vpop.xlane.xlu0 %903
      %v905 = vadd.f32 %v864, %v865
      %906 = vadd.xlane.f32.xlu0 %v905
      %v907 = vpop.xlane.xlu0 %906
      %v908 = vadd.f32 %v866, %v867
      %909 = vadd.xlane.f32.xlu0 %v908
      %v910 = vpop.xlane.xlu0 %909
      %v911 = vadd.f32 %v868, %v869
      %912 = vadd.xlane.f32.xlu0 %v911
      %v913 = vpop.xlane.xlu0 %912
      %v914 = vadd.f32 %v870, %v871
      %915 = vadd.xlane.f32.xlu0 %v914
      %v916 = vpop.xlane.xlu0 %915
      %v917 = vadd.f32 %v872, %v873
      %918 = vadd.xlane.f32.xlu0 %v917
      %v919 = vpop.xlane.xlu0 %918
      %v920 = vadd.f32 %v874, %v875
      %921 = vadd.xlane.f32.xlu0 %v920
      %v922 = vpop.xlane.xlu0 %921
      %v923 = vadd.f32 %v876, %v877
      %924 = vadd.xlane.f32.xlu0 %v923
      %v925 = vpop.xlane.xlu0 %924
      %v926 = vadd.f32 %v830, %v880
      %v927 = vadd.f32 %v831, %v883
      %v928 = vadd.f32 %v832, %v886
      %v929 = vadd.f32 %v833, %v889
      %v930 = vadd.f32 %v834, %v892
      %v931 = vadd.f32 %v835, %v895
      %v932 = vadd.f32 %v836, %v898
      %v933 = vadd.f32 %v837, %v901
      %v934 = vadd.f32 %v838, %v904
      %v935 = vadd.f32 %v839, %v907
      %v936 = vadd.f32 %v840, %v910
      %v937 = vadd.f32 %v841, %v913
      %v938 = vadd.f32 %v842, %v916
      %v939 = vadd.f32 %v843, %v919
      %v940 = vadd.f32 %v844, %v922
      %v941 = vadd.f32 %v845, %v925
      %942 = vst.msk [vmem:[%s265] sm:$0xff] %vm813, %v926
      %943 = vst.msk [vmem:[%s265 + $0x8] sm:$0xff] %vm813, %v927
      %944 = vst.msk [vmem:[%s265 + $0x10] sm:$0xff] %vm813, %v928
      %945 = vst.msk [vmem:[%s265 + $0x18] sm:$0xff] %vm813, %v929
      %946 = vst.msk [vmem:[%s265 + $0x20] sm:$0xff] %vm813, %v930
      %947 = vst.msk [vmem:[%s265 + $0x28] sm:$0xff] %vm813, %v931
      %948 = vst.msk [vmem:[%s265 + $0x30] sm:$0xff] %vm813, %v932
      %949 = vst.msk [vmem:[%s265 + $0x38] sm:$0xff] %vm813, %v933
      %950 = vst.msk [vmem:[%s265 + $0x40] sm:$0xff] %vm813, %v934
      %951 = vst.msk [vmem:[%s265 + $0x48] sm:$0xff] %vm813, %v935
      %952 = vst.msk [vmem:[%s265 + $0x50] sm:$0xff] %vm813, %v936
      %953 = vst.msk [vmem:[%s265 + $0x58] sm:$0xff] %vm813, %v937
      %954 = vst.msk [vmem:[%s265 + $0x60] sm:$0xff] %vm813, %v938
      %955 = vst.msk [vmem:[%s265 + $0x68] sm:$0xff] %vm813, %v939
      %956 = vst.msk [vmem:[%s265 + $0x70] sm:$0xff] %vm813, %v940
      %957 = vst.msk [vmem:[%s265 + $0x78] sm:$0xff] %vm813, %v941
      %p958 = scmp.lt.s32.totalorder %s21, 1
      %s959 = scalar_select %p958, %s21, 1
      %s960 = smul.addr %s959, 16
      %s961 = smul.addr %s960, 8
      %s962 = scalar_lea.vmem %s4, %s961
      %p963 = scmp.lt.s32.totalorder %s21, 1
      %s964 = scalar_select %p963, %s21, 1
      %s965 = smul.addr %s964, 16
      %s966 = smul.addr %s965, 8
      %s967 = scalar_lea.vmem %s5, %s966
      // Predicated region
      $region41: #{tpu_custom_call.1} parent=35 // pred_check
        %p968 = pneg %p138
      $region42: #{tpu_custom_call.1} parent=35 // pred_check_branch
        %970 = sbr.rel (%p968) target = $region44
      $region43: #{tpu_custom_call.1} parent=35 // pred_region
        _
      $region44: #{tpu_custom_call.1} parent=35 // pred_fallthru
        _
      // Predicated region
      $region45: #{tpu_custom_call.1} parent=35 // pred_check
        %p971 = pneg %p164
      $region46: #{tpu_custom_call.1} parent=35 // pred_check_branch
        %973 = sbr.rel (%p971) target = $region48
      $region47: #{tpu_custom_call.1} parent=35 // pred_region
        _
      $region48: #{tpu_custom_call.1} parent=35 // pred_fallthru
        _
    $region36: #{tpu_custom_call.1} parent=5 // pred_fallthru
      _
    %p974 = scmp.le.s32.totalorder 2, %s12
    // Predicated region
    $region49: #{tpu_custom_call.1} parent=5 // pred_check
      %p975 = pneg %p974
    $region50: #{tpu_custom_call.1} parent=5 // pred_check_branch
      %977 = sbr.rel (%p975) target = $region52
    $region51: #{tpu_custom_call.1} parent=5 // pred_region
      %s978 = ssub.s32 %s12, 2
      // Predicated region
      $region53: #{tpu_custom_call.1} parent=51 // pred_check
        %p979 = pneg %p144
      $region54: #{tpu_custom_call.1} parent=51 // pred_check_branch
        %981 = sbr.rel (%p979) target = $region56
      $region55: #{tpu_custom_call.1} parent=51 // pred_region
        %p982 = scmp.lt.s32.totalorder %s23, 1
        %s983 = scalar_select %p982, %s23, 1
        %s984 = smul.addr %s983, 16
        %s985 = smul.addr %s984, 8
        %s986 = scalar_lea.vmem %s4, %s985
      $region56: #{tpu_custom_call.1} parent=51 // pred_fallthru
        _
      // Predicated region
      $region57: #{tpu_custom_call.1} parent=51 // pred_check
        %p987 = pneg %p170
      $region58: #{tpu_custom_call.1} parent=51 // pred_check_branch
        %989 = sbr.rel (%p987) target = $region60
      $region59: #{tpu_custom_call.1} parent=51 // pred_region
        %p990 = scmp.lt.s32.totalorder %s23, 1
        %s991 = scalar_select %p990, %s23, 1
        %s992 = smul.addr %s991, 16
        %s993 = smul.addr %s992, 8
        %s994 = scalar_lea.vmem %s5, %s993
      $region60: #{tpu_custom_call.1} parent=51 // pred_fallthru
        _
    $region52: #{tpu_custom_call.1} parent=5 // pred_fallthru
      _
  $region6: #{tpu_custom_call.1} parent=0 // loop_footer
    %s16 = sadd.s32 1, %s12
  $region7: #{tpu_custom_call.1} parent=0 // loop_footer_branch
    %11 = sbr.rel target = $region3
  $region8: #{tpu_custom_call.1} parent=0 // loop_exit
    _

</llo_original>
